<compile_context>
chip_gen: v7x
topology: tpu7x:2x2x1
jax: 0.10.0
libtpu: 0.0.40
codegen_flags: <defaults>
</compile_context>

<pallas_src>
import functools

import jax
import jax.numpy as jnp
from jax.experimental import pallas as pl
from jax.experimental.pallas import tpu as pltpu

EPS = 1e-5  # nn.GroupNorm default eps


# --------------------------------------------------------------------------
# Pass 1: per-sample GroupNorm(1, C) statistics (mean, 1/sqrt(var + eps)).
# --------------------------------------------------------------------------
def _groupnorm_stats_kernel(x_ref, stats_ref, sum_ref, sq_ref, *, inv_count):
    """grid = (B, S // ts).  x_ref: (1, ts, C_pad).  stats_ref: (1, 2, 128)."""
    si = pl.program_id(1)

    @pl.when(si == 0)
    def _init():
        sum_ref[...] = jnp.zeros(sum_ref.shape, jnp.float32)
        sq_ref[...] = jnp.zeros(sq_ref.shape, jnp.float32)

    x = x_ref[0]                                              # (ts, C_pad) f32
    sum_ref[...] += jnp.sum(x, axis=0, keepdims=True)         # per-lane partials
    sq_ref[...] += jnp.sum(x * x, axis=0, keepdims=True)

    @pl.when(si == pl.num_programs(1) - 1)
    def _fin():
        total = jnp.sum(sum_ref[...], axis=1, keepdims=True)   # (1, 1)
        total2 = jnp.sum(sq_ref[...], axis=1, keepdims=True)   # (1, 1)
        mean = total * inv_count
        # One-pass E[x^2] - mean^2 (guarded against tiny negative cancellation).
        var = jnp.maximum(total2 * inv_count - mean * mean, 0.0)
        rstd = jax.lax.rsqrt(var + EPS)
        lanes = stats_ref.shape[-1]
        stats_ref[0, 0:1, :] = mean + jnp.zeros((1, lanes), jnp.float32)
        stats_ref[0, 1:2, :] = rstd + jnp.zeros((1, lanes), jnp.float32)


# --------------------------------------------------------------------------
# Pass 2: flash attention (+ GroupNorm affine + residual).
# --------------------------------------------------------------------------
def _res_attention_flash_kernel(
        x_q_ref, x_kv_ref, stats_ref, gamma_ref, beta_ref,
        wqkv_ref, bqkv_ref, wo_ref, bo_ref,
        o_ref,
        q_sc, m_sc, l_sc, acc_sc,
        *, c_real, matmul_dtype, approx_recip):
    """grid = (B, S//tq, S//tkv).  Online softmax over the KV axis."""
    ki = pl.program_id(2)
    nkv = pl.num_programs(2)
    C = x_q_ref.shape[-1]                     # padded channel count (lane-dense)

    mean = stats_ref[0, 0:1, 0:1]             # (1, 1) per-sample mean
    rstd = stats_ref[0, 1:2, 0:1]             # (1, 1) per-sample 1/sqrt(var+eps)
    gamma = gamma_ref[0:1, :]                 # (1, C)
    beta = beta_ref[0:1, :]                   # (1, C)
    scale = 1.0 / (float(c_real) ** 0.5)      # folded into q, not the scores

    @pl.when(ki == 0)
    def _init():
        m_sc[...] = jnp.full(m_sc.shape, -jnp.inf, dtype=m_sc.dtype)
        l_sc[...] = jnp.zeros(l_sc.shape, l_sc.dtype)
        acc_sc[...] = jnp.zeros(acc_sc.shape, acc_sc.dtype)
        # Normalize + project the Q tile once per Q tile, cache in scratch.
        xq = x_q_ref[0]                                        # (tq, C) f32
        xqn = ((xq - mean) * rstd) * gamma + beta
        q = jnp.dot(xqn.astype(matmul_dtype), wqkv_ref[:, 0:C],
                    preferred_element_type=jnp.float32)
        q = (q + bqkv_ref[0:1, 0:C]) * scale
        q_sc[...] = q.astype(q_sc.dtype)

    # ---- Normalize + project the KV tile (fused K/V: single (C, 2C) matmul). ----
    xkv = x_kv_ref[0]                                          # (tkv, C) f32
    xkvn = ((xkv - mean) * rstd) * gamma + beta
    kv = jnp.dot(xkvn.astype(matmul_dtype), wqkv_ref[:, C:3 * C],
                 preferred_element_type=jnp.float32)           # (tkv, 2C) f32
    kv = kv + bqkv_ref[0:1, C:3 * C]
    k = kv[:, 0:C].astype(matmul_dtype)
    v = kv[:, C:2 * C].astype(matmul_dtype)

    # ---- Scores: contract on the last dim of both (no explicit k.T). ----
    s = jax.lax.dot_general(q_sc[...], k, (((1,), (1,)), ((), ())),
                            preferred_element_type=jnp.float32)  # (tq, tkv)

    # ---- Online (flash) softmax update. ----
    m_prev = m_sc[...]                                          # (tq, 1)
    m_new = jnp.maximum(m_prev, jnp.max(s, axis=-1, keepdims=True))
    alpha = jnp.exp(m_prev - m_new)
    p = jnp.exp(s - m_new)
    l_sc[...] = alpha * l_sc[...] + jnp.sum(p, axis=-1, keepdims=True)
    acc_sc[...] = alpha * acc_sc[...] + jnp.dot(p.astype(matmul_dtype), v,
                                                preferred_element_type=jnp.float32)
    m_sc[...] = m_new

    @pl.when(ki == nkv - 1)
    def _fin():
        inv_l = pl.reciprocal(l_sc[...], approx=approx_recip)   # EUP slot
        att = (acc_sc[...] * inv_l).astype(matmul_dtype)        # (tq, C)
        out = jnp.dot(att, wo_ref[...], preferred_element_type=jnp.float32)
        out = out + bo_ref[0:1, :]
        # Residual with the ORIGINAL (un-normalized) input tile.
        o_ref[0] = (out + x_q_ref[0]).astype(o_ref.dtype)


# --------------------------------------------------------------------------
# Host-side wrapper.
# --------------------------------------------------------------------------
def _round_up(n, m):
    return ((n + m - 1) // m) * m


def _pad_last(a, target):
    pad = target - a.shape[-1]
    if pad == 0:
        return a
    return jnp.pad(a, [(0, 0)] * (a.ndim - 1) + [(0, pad)])


def _pick_tile(n, cap):
    """Largest divisor of n that is <= cap and a multiple of 8 (else n itself)."""
    if n <= cap:
        return n
    for d in range(min(cap, n), 0, -1):
        if n % d == 0 and d % 8 == 0:
            return d
    return n


def res_attention_pallas(x_nchw, params, *, tq=None, tkv=None, ts=None,
                         matmul_dtype=jnp.float32):
    """x_nchw: (B, C, H, W) float32.  Returns (B, C, H, W) float32."""
    B, C, H, W = x_nchw.shape
    S = H * W
    C_pad = _round_up(C, 128)

    # NCHW -> (B, S, C_pad) channels-last, zero-padded channels (lane-dense).
    x = jnp.transpose(x_nchw, (0, 2, 3, 1)).reshape(B, S, C).astype(jnp.float32)
    x = _pad_last(x, C_pad)

    # Fused + zero-padded parameters.  Padded gamma/beta/biases are 0 so padded
    # channels stay exactly 0 through norm, projections and the residual add.
    def pad_w(w):
        return jnp.pad(w, ((0, C_pad - C), (0, C_pad - C)))

    w_qkv = jnp.concatenate(
        [pad_w(params["wq"]), pad_w(params["wk"]), pad_w(params["wv"])],
        axis=1).astype(matmul_dtype)                               # (C_pad, 3*C_pad)
    b_qkv = jnp.concatenate(
        [_pad_last(params["bq"], C_pad), _pad_last(params["bk"], C_pad),
         _pad_last(params["bv"], C_pad)], axis=1).astype(jnp.float32)
    w_o = pad_w(params["wo"]).astype(matmul_dtype)
    b_o = _pad_last(params["bo"], C_pad).astype(jnp.float32)
    gamma = _pad_last(params["gamma"], C_pad).astype(jnp.float32)
    beta = _pad_last(params["beta"], C_pad).astype(jnp.float32)

    ts = ts if ts is not None else _pick_tile(S, 1024)
    tq = tq if tq is not None else _pick_tile(S, 256)
    tkv = tkv if tkv is not None else _pick_tile(S, 512)
    assert S % ts == 0 and S % tq == 0 and S % tkv == 0, "tiles must divide H*W"

    # Explicit VMEM budget derived from the tile plan (with headroom), capped at
    # ~48 MiB so the same plan also fits v7x's 64 MiB physical VMEM.
    f32b = 4
    wsz = jnp.dtype(matmul_dtype).itemsize
    est_bytes = (
        2 * tq * C_pad * f32b + 2 * tkv * C_pad * f32b + 2 * tq * C_pad * f32b
        + 4 * C_pad * C_pad * wsz
        + 7 * C_pad * f32b + 2 * 128 * f32b
        + tq * C_pad * wsz + 2 * tq * f32b + tq * C_pad * f32b
        + 3 * tq * tkv * f32b)
    vmem_limit = int(min(max(2 * est_bytes, 32 * 1024 * 1024), 48 * 1024 * 1024))

    # ---- Pass 1: GroupNorm(1, C) statistics (denominator uses REAL channels). ----
    stats = pl.pallas_call(
        functools.partial(_groupnorm_stats_kernel, inv_count=1.0 / float(S * C)),
        out_shape=jax.ShapeDtypeStruct((B, 2, 128), jnp.float32),
        grid_spec=pltpu.PrefetchScalarGridSpec(
            num_scalar_prefetch=0,
            grid=(B, S // ts),
            in_specs=[pl.BlockSpec((1, ts, C_pad), lambda b, s: (b, s, 0))],
            out_specs=pl.BlockSpec((1, 2, 128), lambda b, s: (b, 0, 0)),
            scratch_shapes=[pltpu.VMEM((1, C_pad), jnp.float32),
                            pltpu.VMEM((1, C_pad), jnp.float32)]),
        compiler_params=pltpu.CompilerParams(
            dimension_semantics=("parallel", "arbitrary"),
            vmem_limit_bytes=vmem_limit),
    )(x)

    # ---- Pass 2: flash attention + residual. ----
    def run(single_buffer_consts):
        def const_spec(shape, imap):
            kwargs = {}
            if single_buffer_consts and hasattr(pl, "Buffered"):
                # Constant-index operands never get re-fetched; single-buffer them.
                kwargs["pipeline_mode"] = pl.Buffered(1)
            return pl.BlockSpec(shape, imap, **kwargs)

        kernel = functools.partial(
            _res_attention_flash_kernel,
            c_real=C,
            matmul_dtype=matmul_dtype,
            approx_recip=(matmul_dtype != jnp.float32))

        return pl.pallas_call(
            kernel,
            out_shape=jax.ShapeDtypeStruct((B, S, C_pad), jnp.float32),
            grid_spec=pltpu.PrefetchScalarGridSpec(
                num_scalar_prefetch=0,
                grid=(B, S // tq, S // tkv),
                in_specs=[
                    pl.BlockSpec((1, tq, C_pad), lambda b, qi, ki: (b, qi, 0)),   # x (Q rows + skip)
                    pl.BlockSpec((1, tkv, C_pad), lambda b, qi, ki: (b, ki, 0)),  # x (KV rows)
                    const_spec((1, 2, 128), lambda b, qi, ki: (b, 0, 0)),         # stats
                    const_spec((1, C_pad), lambda b, qi, ki: (0, 0)),             # gamma
                    const_spec((1, C_pad), lambda b, qi, ki: (0, 0)),             # beta
                    const_spec((C_pad, 3 * C_pad), lambda b, qi, ki: (0, 0)),     # Wqkv (fused)
                    const_spec((1, 3 * C_pad), lambda b, qi, ki: (0, 0)),         # bqkv (fused)
                    const_spec((C_pad, C_pad), lambda b, qi, ki: (0, 0)),         # Wo
                    const_spec((1, C_pad), lambda b, qi, ki: (0, 0)),             # bo
                ],
                out_specs=pl.BlockSpec((1, tq, C_pad), lambda b, qi, ki: (b, qi, 0)),
                scratch_shapes=[
                    pltpu.VMEM((tq, C_pad), matmul_dtype),   # cached scaled q
                    pltpu.VMEM((tq, 1), jnp.float32),        # running max
                    pltpu.VMEM((tq, 1), jnp.float32),        # running denominator
                    pltpu.VMEM((tq, C_pad), jnp.float32),    # output accumulator
                ]),
            compiler_params=pltpu.CompilerParams(
                dimension_semantics=("parallel", "parallel", "arbitrary"),
                vmem_limit_bytes=vmem_limit),
        )(x, x, stats, gamma, beta, w_qkv, b_qkv, w_o, b_o)

    try:
        out_p = run(True)
    except Exception:
        # Conservative fallback: identical kernel with default double-buffering.
        out_p = run(False)

    out = out_p[:, :, :C].reshape(B, H, W, C)
    return jnp.transpose(out, (0, 3, 1, 2))


# --------------------------------------------------------------------------
# Pure-JAX reference (f32, exact softmax) for correctness checking.
# --------------------------------------------------------------------------
def res_attention_ref(x_nchw, params):
    B, C, H, W = x_nchw.shape
    S = H * W
    x = jnp.transpose(x_nchw, (0, 2, 3, 1)).reshape(B, S, C)

    mean = jnp.mean(x, axis=(1, 2), keepdims=True)
    var = jnp.mean((x - mean) ** 2, axis=(1, 2), keepdims=True)
    xn = (x - mean) * jax.lax.rsqrt(var + EPS)
    xn = xn * params["gamma"][0][None, None, :] + params["beta"][0][None, None, :]

    q = xn @ params["wq"] + params["bq"][0][None, None, :]
    k = xn @ params["wk"] + params["bk"][0][None, None, :]
    v = xn @ params["wv"] + params["bv"][0][None, None, :]
    scores = jnp.einsum("bqc,bkc->bqk", q, k) / jnp.sqrt(jnp.float32(C))
    p = jax.nn.softmax(scores, axis=-1)
    att = jnp.einsum("bqk,bkc->bqc", p, v)
    out = att @ params["wo"] + params["bo"][0][None, None, :]
    out = out + x
    return jnp.transpose(out.reshape(B, H, W, C), (0, 3, 1, 2))


def init_params(key, C):
    ks = jax.random.split(key, 4)
    std = 1.0 / jnp.sqrt(jnp.float32(C))
    return {
        "gamma": jnp.ones((1, C), jnp.float32),   # GroupNorm defaults
        "beta": jnp.zeros((1, C), jnp.float32),
        "wq": jax.random.normal(ks[0], (C, C), jnp.float32) * std,
        "bq": jnp.zeros((1, C), jnp.float32),
        "wk": jax.random.normal(ks[1], (C, C), jnp.float32) * std,
        "bk": jnp.zeros((1, C), jnp.float32),
        "wv": jax.random.normal(ks[2], (C, C), jnp.float32) * std,
        "bv": jnp.zeros((1, C), jnp.float32),
        "wo": jax.random.normal(ks[3], (C, C), jnp.float32) * std,
        "bo": jnp.zeros((1, C), jnp.float32),
    }


if __name__ == "__main__":
    key = jax.random.PRNGKey(0)
    k_x, k_p = jax.random.split(key)

    B, C, H, W = 2, 4, 16, 16
    x = jax.random.normal(k_x, (B, C, H, W), jnp.float32)
    params = init_params(k_p, C)

    ref = jax.block_until_ready(res_attention_ref(x, params))

    # Small tiles so the flash KV loop / online softmax path is exercised.
    # f32 MXU path (exact reciprocal) — tight check.
    out_f32 = jax.block_until_ready(
        res_attention_pallas(x, params, tq=64, tkv=64, ts=64,
                             matmul_dtype=jnp.float32))
    assert out_f32.shape == (B, C, H, W)
    assert jnp.allclose(out_f32, ref, atol=1e-3, rtol=1e-3), "f32 path mismatch"

    # bf16 MXU path (f32 softmax state/accumulator, approx reciprocal) — loose check.
    out_bf16 = jax.block_until_ready(
        res_attention_pallas(x, params, tq=64, tkv=64, ts=64,
                             matmul_dtype=jnp.bfloat16))
    assert jnp.allclose(out_bf16, ref, atol=5e-2, rtol=5e-2), "bf16 path mismatch"

    print("KERNEL_OK")
</pallas_src>

<mosaic_0001>
module attributes {stable_mosaic.version = 11 : i64} {
  func.func @_groupnorm_stats_kernel(%arg0: i32, %arg1: i32, %arg2: memref<1x64x128xf32, #tpu.memory_space<vmem>>, %arg3: memref<1x2x128xf32, #tpu.memory_space<vmem>>, %arg4: memref<1x128xf32, #tpu.memory_space<vmem>>, %arg5: memref<1x128xf32, #tpu.memory_space<vmem>>) attributes {dimension_semantics = [#tpu.dimension_semantics<parallel>, #tpu.dimension_semantics<arbitrary>], iteration_bounds = array<i64: 2, 4>, scalar_prefetch = 0 : i64, scratch_operands = 2 : i64, tpu.core_type = #tpu.core_type<tc>, window_params = [{transform_indices = @transform_0, window_bounds = array<i64: 1, 64, 128>}, {transform_indices = @transform_1, window_bounds = array<i64: 1, 2, 128>}]} {
    %c0_i32 = arith.constant 0 : i32
    %0 = arith.cmpi eq, %arg1, %c0_i32 : i32
    %1 = arith.extui %0 : i1 to i32
    %c0_i32_0 = arith.constant 0 : i32
    %2 = arith.cmpi ne, %1, %c0_i32_0 : i32
    scf.if %2 {
      %cst_13 = arith.constant 0.000000e+00 : f32
      %19 = vector.broadcast %cst_13 : f32 to vector<1x128xf32>
      %c0_14 = arith.constant 0 : index
      %c0_15 = arith.constant 0 : index
      %20 = vector.load %arg4[%c0_14, %c0_15] : memref<1x128xf32, #tpu.memory_space<vmem>>, vector<1x128xf32>
      tpu.vector_store %arg4[%c0_14, %c0_15], %19 {strides = array<i32>} : memref<1x128xf32, #tpu.memory_space<vmem>>, vector<1x128xf32>,
      %cst_16 = arith.constant 0.000000e+00 : f32
      %21 = vector.broadcast %cst_16 : f32 to vector<1x128xf32>
      %c0_17 = arith.constant 0 : index
      %c0_18 = arith.constant 0 : index
      %22 = vector.load %arg5[%c0_17, %c0_18] : memref<1x128xf32, #tpu.memory_space<vmem>>, vector<1x128xf32>
      tpu.vector_store %arg5[%c0_17, %c0_18], %21 {strides = array<i32>} : memref<1x128xf32, #tpu.memory_space<vmem>>, vector<1x128xf32>,
    } else {
    }
    %c0 = arith.constant 0 : index
    %c0_1 = arith.constant 0 : index
    %c0_2 = arith.constant 0 : index
    %3 = vector.load %arg2[%c0, %c0_1, %c0_2] : memref<1x64x128xf32, #tpu.memory_space<vmem>>, vector<1x64x128xf32>
    %4 = vector.shape_cast %3 : vector<1x64x128xf32> to vector<64x128xf32>
    %c0_3 = arith.constant 0 : index
    %c0_4 = arith.constant 0 : index
    %5 = vector.load %arg4[%c0_3, %c0_4] : memref<1x128xf32, #tpu.memory_space<vmem>>, vector<1x128xf32>
    %cst = arith.constant dense<0.000000e+00> : vector<128xf32>
    %6 = vector.multi_reduction <add>, %4, %cst [0] : vector<64x128xf32> to vector<128xf32>
    %7 = vector.shape_cast %6 : vector<128xf32> to vector<1x128xf32>
    %8 = arith.addf %5, %7 : vector<1x128xf32>
    %c0_5 = arith.constant 0 : index
    %c0_6 = arith.constant 0 : index
    %9 = vector.load %arg4[%c0_5, %c0_6] : memref<1x128xf32, #tpu.memory_space<vmem>>, vector<1x128xf32>
    tpu.vector_store %arg4[%c0_5, %c0_6], %8 {strides = array<i32>} : memref<1x128xf32, #tpu.memory_space<vmem>>, vector<1x128xf32>,
    %c0_7 = arith.constant 0 : index
    %c0_8 = arith.constant 0 : index
    %10 = vector.load %arg5[%c0_7, %c0_8] : memref<1x128xf32, #tpu.memory_space<vmem>>, vector<1x128xf32>
    %11 = arith.mulf %4, %4 : vector<64x128xf32>
    %cst_9 = arith.constant dense<0.000000e+00> : vector<128xf32>
    %12 = vector.multi_reduction <add>, %11, %cst_9 [0] : vector<64x128xf32> to vector<128xf32>
    %13 = vector.shape_cast %12 : vector<128xf32> to vector<1x128xf32>
    %14 = arith.addf %10, %13 : vector<1x128xf32>
    %c0_10 = arith.constant 0 : index
    %c0_11 = arith.constant 0 : index
    %15 = vector.load %arg5[%c0_10, %c0_11] : memref<1x128xf32, #tpu.memory_space<vmem>>, vector<1x128xf32>
    tpu.vector_store %arg5[%c0_10, %c0_11], %14 {strides = array<i32>} : memref<1x128xf32, #tpu.memory_space<vmem>>, vector<1x128xf32>,
    %c3_i32 = arith.constant 3 : i32
    %16 = arith.cmpi eq, %arg1, %c3_i32 : i32
    %17 = arith.extui %16 : i1 to i32
    %c0_i32_12 = arith.constant 0 : i32
    %18 = arith.cmpi ne, %17, %c0_i32_12 : i32
    scf.if %18 {
      %c0_13 = arith.constant 0 : index
      %c0_14 = arith.constant 0 : index
      %19 = vector.load %arg4[%c0_13, %c0_14] : memref<1x128xf32, #tpu.memory_space<vmem>>, vector<1x128xf32>
      %cst_15 = arith.constant dense<0.000000e+00> : vector<1xf32>
      %20 = vector.multi_reduction <add>, %19, %cst_15 [1] : vector<1x128xf32> to vector<1xf32>
      %21 = vector.shape_cast %20 : vector<1xf32> to vector<1x1xf32>
      %c0_16 = arith.constant 0 : index
      %c0_17 = arith.constant 0 : index
      %22 = vector.load %arg5[%c0_16, %c0_17] : memref<1x128xf32, #tpu.memory_space<vmem>>, vector<1x128xf32>
      %cst_18 = arith.constant dense<0.000000e+00> : vector<1xf32>
      %23 = vector.multi_reduction <add>, %22, %cst_18 [1] : vector<1x128xf32> to vector<1xf32>
      %24 = vector.shape_cast %23 : vector<1xf32> to vector<1x1xf32>
      %cst_19 = arith.constant 9.765625E-4 : f32
      %25 = vector.broadcast %cst_19 : f32 to vector<1x1xf32>
      %26 = arith.mulf %21, %25 : vector<1x1xf32>
      %cst_20 = arith.constant 9.765625E-4 : f32
      %27 = vector.broadcast %cst_20 : f32 to vector<1x1xf32>
      %28 = arith.mulf %24, %27 : vector<1x1xf32>
      %29 = arith.mulf %26, %26 : vector<1x1xf32>
      %30 = arith.subf %28, %29 : vector<1x1xf32>
      %cst_21 = arith.constant 0.000000e+00 : f32
      %31 = vector.broadcast %cst_21 : f32 to vector<1x1xf32>
      %32 = arith.maximumf %30, %31 : vector<1x1xf32>
      %cst_22 = arith.constant 9.99999974E-6 : f32
      %33 = vector.broadcast %cst_22 : f32 to vector<1x1xf32>
      %34 = arith.addf %32, %33 : vector<1x1xf32>
      %35 = math.rsqrt %34 : vector<1x1xf32>
      %cst_23 = arith.constant 0.000000e+00 : f32
      %36 = vector.broadcast %cst_23 : f32 to vector<1x128xf32>
      %37 = vector.broadcast %26 : vector<1x1xf32> to vector<1x128xf32>
      %38 = arith.addf %37, %36 : vector<1x128xf32>
      %c0_24 = arith.constant 0 : index
      %c0_25 = arith.constant 0 : index
      %c0_26 = arith.constant 0 : index
      %39 = vector.load %arg3[%c0_24, %c0_25, %c0_26] : memref<1x2x128xf32, #tpu.memory_space<vmem>>, vector<1x1x128xf32>
      %40 = vector.shape_cast %39 : vector<1x1x128xf32> to vector<1x128xf32>
      %41 = vector.shape_cast %38 : vector<1x128xf32> to vector<1x1x128xf32>
      tpu.vector_store %arg3[%c0_24, %c0_25, %c0_26], %41 {strides = array<i32>} : memref<1x2x128xf32, #tpu.memory_space<vmem>>, vector<1x1x128xf32>,
      %cst_27 = arith.constant 0.000000e+00 : f32
      %42 = vector.broadcast %cst_27 : f32 to vector<1x128xf32>
      %43 = vector.broadcast %35 : vector<1x1xf32> to vector<1x128xf32>
      %44 = arith.addf %43, %42 : vector<1x128xf32>
      %c0_28 = arith.constant 0 : index
      %c1 = arith.constant 1 : index
      %c0_29 = arith.constant 0 : index
      %45 = vector.load %arg3[%c0_28, %c1, %c0_29] : memref<1x2x128xf32, #tpu.memory_space<vmem>>, vector<1x1x128xf32>
      %46 = vector.shape_cast %45 : vector<1x1x128xf32> to vector<1x128xf32>
      %47 = vector.shape_cast %44 : vector<1x128xf32> to vector<1x1x128xf32>
      tpu.vector_store %arg3[%c0_28, %c1, %c0_29], %47 {strides = array<i32>} : memref<1x2x128xf32, #tpu.memory_space<vmem>>, vector<1x1x128xf32>,
    } else {
    }
    return
  }
  func.func @transform_0(%arg0: i32, %arg1: i32) -> (i32, i32, i32) {
    %c0_i32 = arith.constant 0 : i32
    %c0_i32_0 = arith.constant 0 : i32
    return %arg0, %arg1, %c0_i32 : i32, i32, i32
  }
  func.func @transform_1(%arg0: i32, %arg1: i32) -> (i32, i32, i32) {
    %c0_i32 = arith.constant 0 : i32
    %c0_i32_0 = arith.constant 0 : i32
    %c0_i32_1 = arith.constant 0 : i32
    return %arg0, %c0_i32, %c0_i32_0 : i32, i32, i32
  }
}

</mosaic_0001>

<llo_original>
// kernel: tpu_custom_call.1
$region0: #{tpu_custom_call.1}
  #allocation0 [shape = 'u32[]', space=smem, size = 0x4, offset = 0x4, fixed_abs, tag = 'smem constant byte address 0x4 - core index']
  #allocation1 [shape = 'u32[144,128]{1,0:T(1,128)}', space=vmem, size = 0x12000, scoped, tag = 'internal scratch']
  #allocation2 [shape = 'f32[1,128]{1,0:T(1,128)}', space=vmem, size = 0x200, scoped, tag = 'scratch operand']
  #allocation3 [shape = 'f32[1,128]{1,0:T(1,128)}', space=vmem, size = 0x200, scoped, tag = 'scratch operand']
  %s0 = inlined_call_operand.hbm [shape: f32[2,256,128], index: 0, kind: input, shape index: {}]
  %s1 = inlined_call_operand.hbm [shape: f32[2,2,128], index: 1, kind: output, shape index: {}]
  %s2 = sld [smem:[#allocation0]]
  $region49: #{tpu_custom_call.1} parent=0
    _
  %s4 = ssub.s32 1, %s2
  %s5 = scalar_select 0, %s4, %s2
  $region1: #{tpu_custom_call.1} parent=0
    #allocation4 [shape = 'u8[65536]{0}', space=vmem, size = 0x10000, scoped, tag = 'input window, operand 0']
    #allocation5 [shape = 's32[2]{0}', space=sflag, size = 0x8, scoped, tag = 'scoped memory for tpu_custom_call.1']
    #allocation6 [shape = 's32[2]{0}', space=sflag, size = 0x8, scoped, tag = 'scoped memory for tpu_custom_call.1']
    #allocation7 [shape = 'u8[2048]{0}', space=vmem, size = 0x800, scoped, tag = 'output window, operand 0']
    %6 = vsyncpa [#allocation5], 0
    %s7 = scalar_lea.sflag [#allocation5], 1
    %8 = vsyncpa %s7, 0
    %9 = vsyncpa [#allocation6], 0
    %s10 = scalar_lea.sflag [#allocation6], 1
    %11 = vsyncpa %s10, 0
    loop: start=0, step=1, limit=10
    $region2: #{tpu_custom_call.1} parent=1 // loop_pre_header
      _
    $region3: #{tpu_custom_call.1} parent=1 // loop_header
      %s13 = sphi 0, %s17
      %p14 = scmp.ge.s32.totalorder %s13, 10
      %s20 = sphi 0, %s32
      %s21 = sphi 0, %s28
      %s22 = sphi 0, %s20
      %s23 = sphi 0, %s21
      %s24 = sphi 0, %s22
      %s25 = sphi 0, %s23
      %s37 = sphi 0, %s39
      %s40 = sphi 0, %s37
      %s41 = sphi 0, %s40
      %s57 = sphi 0, %s41
      %s63 = sphi 0, %s65
      %s66 = sphi 0, %s63
      %s67 = sphi 0, %s66
      %s83 = sphi 0, %s67
    $region4: #{tpu_custom_call.1} parent=1 // loop_header_branch
      %16 = sbr.rel (%p14) target = $region8
    $region5: #{tpu_custom_call.1} parent=1 // loop_body
      %s18 = ssub.s32 %s13, 1
      %s19 = ssub.s32 %s13, 2
      %s26 = sadd.s32 1, %s21
      %p27 = scmp.ge.s32.totalorder %s26, 4
      %s28 = scalar_select %p27, 0, %s26
      %s29 = sadd.s32 1, %s20
      %s30 = scalar_select %p27, %s29, %s20
      %p31 = scmp.ge.s32.totalorder %s30, 2
      %s32 = scalar_select %p31, 0, %s30
      %s33 = ssub.s32 %s20, %s32
      %s34 = ssub.s32 %s21, %s28
      %s35 = sor.u32 %s33, %s34
      %p36 = scmp.eq.s32.totalorder %s35, 0
      %s38 = sadd.s32 %s37, 1
      %s39 = scalar_select %p36, %s37, %s38
      %p42 = pneg %p36
      %p43 = scmp.eq.s32.totalorder %s13, 7
      %p44 = por %p42, %p43
      %p45 = scmp.ne.s32.totalorder %s37, %s40
      %p46 = scmp.eq.s32.totalorder %s13, 0
      %p47 = por %p45, %p46
      %p48 = scmp.ne.s32.totalorder %s37, %s40
      %p49 = scmp.eq.s32.totalorder %s18, 7
      %p50 = por %p48, %p49
      %p51 = scmp.ne.s32.totalorder %s40, %s41
      %p52 = scmp.eq.s32.totalorder %s18, 0
      %p53 = por %p51, %p52
      %p54 = scmp.ne.s32.totalorder %s40, %s41
      %p55 = scmp.eq.s32.totalorder %s19, 7
      %p56 = por %p54, %p55
      %p58 = scmp.ne.s32.totalorder %s41, %s57
      %p59 = scmp.eq.s32.totalorder %s19, 0
      %p60 = por %p58, %p59
      %s61 = ssub.s32 %s20, %s32
      %p62 = scmp.eq.s32.totalorder %s61, 0
      %s64 = sadd.s32 %s63, 1
      %s65 = scalar_select %p62, %s63, %s64
      %p68 = pneg %p62
      %p69 = scmp.eq.s32.totalorder %s13, 7
      %p70 = por %p68, %p69
      %p71 = scmp.ne.s32.totalorder %s63, %s66
      %p72 = scmp.eq.s32.totalorder %s13, 0
      %p73 = por %p71, %p72
      %p74 = scmp.ne.s32.totalorder %s63, %s66
      %p75 = scmp.eq.s32.totalorder %s18, 7
      %p76 = por %p74, %p75
      %p77 = scmp.ne.s32.totalorder %s66, %s67
      %p78 = scmp.eq.s32.totalorder %s18, 0
      %p79 = por %p77, %p78
      %p80 = scmp.ne.s32.totalorder %s66, %s67
      %p81 = scmp.eq.s32.totalorder %s19, 7
      %p82 = por %p80, %p81
      %p84 = scmp.ne.s32.totalorder %s67, %s83
      %p85 = scmp.eq.s32.totalorder %s19, 0
      %p86 = por %p84, %p85
      %p87 = scmp.le.s32.totalorder 1, %s13
      %p88 = scmp.lt.s32.totalorder %s13, 9
      %p89 = pnand %p87, %p88
      %p90 = pneg %p89
      // Predicated region
      $region9: #{tpu_custom_call.1} parent=5 // pred_check
        _
      $region10: #{tpu_custom_call.1} parent=5 // pred_check_branch
        %92 = sbr.rel (%p89) target = $region12
      $region11: #{tpu_custom_call.1} parent=5 // pred_region
        %s93 = ssub.s32 %s13, 1
      $region12: #{tpu_custom_call.1} parent=5 // pred_fallthru
        _
      %p94 = scmp.lt.s32.totalorder %s13, 8
      // Predicated region
      $region13: #{tpu_custom_call.1} parent=5 // pred_check
        %p95 = pneg %p94
      $region14: #{tpu_custom_call.1} parent=5 // pred_check_branch
        %97 = sbr.rel (%p95) target = $region16
      $region15: #{tpu_custom_call.1} parent=5 // pred_region
        // Predicated region
        $region17: #{tpu_custom_call.1} parent=15 // pred_check
          %p98 = pneg %p47
        $region18: #{tpu_custom_call.1} parent=15 // pred_check_branch
          %100 = sbr.rel (%p98) target = $region20
        $region19: #{tpu_custom_call.1} parent=15 // pred_region
          %s101 = sand.u32 %s37, 1
          %s102 = scalar_lea.sflag [#allocation5], %s101
          %s103 = sand.u32 %s37, 1
          %s104 = smul.addr %s103, 64
          %s105 = scalar_lea.vmem [#allocation4], %s104
          %s106 = smul.u32 8, %s21
          %s108 = ssub.s32 1024, 1024
          %109 = vsyncadd %s102, %s108
          %s110 = smul.addr %s20, 32
          %s111 = sadd.s32 %s106, %s110
          %s112 = smul.addr %s111, 128
          %s113 = scalar_lea.hbm %s0, %s112
          %s114 = sshll.u32 %s105, 4
          %s115 = int_to_ptr.vmem [resolvable:$true] %s114
          %120 = dma.hbm_to_vmem [thread:$0]  %s113, 1024, %s115, %s102, 128, 128, 8
        $region20: #{tpu_custom_call.1} parent=15 // pred_fallthru
          _
      $region16: #{tpu_custom_call.1} parent=5 // pred_fallthru
        _
      %p121 = scmp.le.s32.totalorder 1, %s13
      %p122 = scmp.lt.s32.totalorder %s13, 9
      %p123 = pnand %p121, %p122
      %p124 = pneg %p123
      // Predicated region
      $region21: #{tpu_custom_call.1} parent=5 // pred_check
        _
      $region22: #{tpu_custom_call.1} parent=5 // pred_check_branch
        %126 = sbr.rel (%p123) target = $region24
      $region23: #{tpu_custom_call.1} parent=5 // pred_region
        %s127 = ssub.s32 %s13, 1
        %s128 = sand.u32 %s40, 1
        %s129 = scalar_lea.sflag [#allocation5], %s128
        %s130 = sand.u32 %s40, 1
        %s131 = smul.addr %s130, 64
        %s132 = scalar_lea.vmem [#allocation4], %s131
        // Predicated region
        $region25: #{tpu_custom_call.1} parent=23 // pred_check
          %p133 = pneg %p53
        $region26: #{tpu_custom_call.1} parent=23 // pred_check_branch
          %135 = sbr.rel (%p133) target = $region28
        $region27: #{tpu_custom_call.1} parent=23 // pred_region
          %136 = dma.done %s129, 1024
        $region28: #{tpu_custom_call.1} parent=23 // pred_fallthru
          _
        %s137 = sand.u32 %s40, 1
        %s138 = scalar_lea.sflag [#allocation5], %s137
        %s139 = sand.u32 %s40, 1
        %s140 = smul.addr %s139, 64
        %s141 = scalar_lea.vmem [#allocation4], %s140
        %p142 = pneg %p53
        %p143 = pneg %p50
        %p144 = pneg %p79
        %p145 = pneg %p76
        %s146 = sand.u32 %s66, 1
        %s147 = scalar_lea.sflag [#allocation6], %s146
        %s148 = sand.u32 %s66, 1
        %s149 = smul.addr %s148, 2
        %s150 = scalar_lea.vmem [#allocation7], %s149
        %s151 = smul.u32 8, %s23
        %p152 = scmp.eq.s32.totalorder %s23, 0
        // Predicated region
        $region29: #{tpu_custom_call.1} parent=23 // pred_check
          %p153 = pneg %p152
        $region30: #{tpu_custom_call.1} parent=23 // pred_check_branch
          %155 = sbr.rel (%p153) target = $region32
        $region31: #{tpu_custom_call.1} parent=23 // pred_region
          %156 = vst [vmem:[#allocation2] sm:$0x1] 0.0
          %157 = vst [vmem:[#allocation3] sm:$0x1] 0.0
        $region32: #{tpu_custom_call.1} parent=23 // pred_fallthru
          _
        %v158 = vld [vmem:[%s132] sm:$0xff]
        %v159 = vld [vmem:[%s132 + $0x8] sm:$0xff]
        %v160 = vld [vmem:[%s132 + $0x10] sm:$0xff]
        %v161 = vld [vmem:[%s132 + $0x18] sm:$0xff]
        %v162 = vld [vmem:[%s132 + $0x20] sm:$0xff]
        %v163 = vld [vmem:[%s132 + $0x28] sm:$0xff]
        %v164 = vld [vmem:[%s132 + $0x30] sm:$0xff]
        %v165 = vld [vmem:[%s132 + $0x38] sm:$0xff]
        %v166 = vld [vmem:[#allocation2] sm:$0x1]
        %v167 = vadd.f32 %v158, %v159
        %v168 = vadd.f32 %v167, %v160
        %v169 = vadd.f32 %v168, %v161
        %v170 = vadd.f32 %v169, %v162
        %v171 = vadd.f32 %v170, %v163
        %v172 = vadd.f32 %v171, %v164
        %v173 = vadd.f32 %v172, %v165
        %v174 = vrot.slane %v173, 4
        %v175 = vadd.f32 %v173, %v174
        %v176 = vrot.slane %v175, 2
        %v177 = vadd.f32 %v175, %v176
        %v178 = vrot.slane %v177, 1
        %v179 = vadd.f32 %v177, %v178
        %v180 = vadd.f32 %v166, %v179
        %181 = vst [vmem:[#allocation2] sm:$0x1] %v180
        %v182 = vld [vmem:[#allocation3] sm:$0x1]
        %v183 = vmul.f32 %v158, %v158
        %v184 = vmul.f32 %v159, %v159
        %v185 = vmul.f32 %v160, %v160
        %v186 = vmul.f32 %v161, %v161
        %v187 = vmul.f32 %v162, %v162
        %v188 = vmul.f32 %v163, %v163
        %v189 = vmul.f32 %v164, %v164
        %v190 = vmul.f32 %v165, %v165
        %v191 = vadd.f32 %v183, %v184
        %v192 = vadd.f32 %v191, %v185
        %v193 = vadd.f32 %v192, %v186
        %v194 = vadd.f32 %v193, %v187
        %v195 = vadd.f32 %v194, %v188
        %v196 = vadd.f32 %v195, %v189
        %v197 = vadd.f32 %v196, %v190
        %v198 = vrot.slane %v197, 4
        %v199 = vadd.f32 %v197, %v198
        %v200 = vrot.slane %v199, 2
        %v201 = vadd.f32 %v199, %v200
        %v202 = vrot.slane %v201, 1
        %v203 = vadd.f32 %v201, %v202
        %v204 = vadd.f32 %v182, %v203
        %205 = vst [vmem:[#allocation3] sm:$0x1] %v204
        %p206 = scmp.eq.s32.totalorder %s23, 3
        // Predicated region
        $region33: #{tpu_custom_call.1} parent=23 // pred_check
          %p207 = pneg %p206
        $region34: #{tpu_custom_call.1} parent=23 // pred_check_branch
          %209 = sbr.rel (%p207) target = $region36
        $region35: #{tpu_custom_call.1} parent=23 // pred_region
          %v210 = vld [vmem:[#allocation2] sm:$0x1]
          %vm211 = vcmask 1040384
          %v212 = vsel %vm211, %v210, 0.0
          %213 = vadd.xlane.f32.xlu0 %v212
          %v214 = vpop.xlane.xlu0 %213
          %v215 = vld [vmem:[#allocation3] sm:$0x1]
          %v216 = vsel %vm211, %v215, 0.0
          %217 = vadd.xlane.f32.xlu0 %v216
          %v218 = vpop.xlane.xlu0 %217
          %v219 = vmul.f32 %v214, 0.0009765625
          %v220 = vmul.f32 %v218, 0.0009765625
          %v221 = vmul.f32 %v219, %v219
          %v222 = vsub.f32 %v220, %v221
          %v223 = vmax.f32 %v222, 0.0
          %v224 = vadd.f32 %v223, 1e-05
          %v225 = vrsqrt.pop %v224
          %v226 = vadd.f32 %v219, 0.0
          %227 = vst [vmem:[%s150] sm:$0x1] %v226
          %v228 = vadd.f32 %v225, 0.0
          %229 = vst [vmem:[%s150 + $0x1] sm:$0x1] %v228
        $region36: #{tpu_custom_call.1} parent=23 // pred_fallthru
          _
        %s230 = sand.u32 %s66, 1
        %s231 = scalar_lea.sflag [#allocation6], %s230
        %s232 = sand.u32 %s66, 1
        %s233 = smul.addr %s232, 2
        %s234 = scalar_lea.vmem [#allocation7], %s233
        // Predicated region
        $region37: #{tpu_custom_call.1} parent=23 // pred_check
          %p235 = pneg %p76
        $region38: #{tpu_custom_call.1} parent=23 // pred_check_branch
          %237 = sbr.rel (%p235) target = $region40
        $region39: #{tpu_custom_call.1} parent=23 // pred_region
          %s239 = ssub.s32 32, 32
          %240 = vsyncadd %s231, %s239
          %s241 = smul.addr %s22, 32
          %s242 = scalar_lea.hbm %s1, %s241
          %s244 = sshll.u32 %s234, 4
          %s245 = int_to_ptr.vmem [resolvable:$true] %s244
          %247 = dma.vmem_to_hbm [thread:$0]  %s245, 32, %s242, %s231
        $region40: #{tpu_custom_call.1} parent=23 // pred_fallthru
          _
      $region24: #{tpu_custom_call.1} parent=5 // pred_fallthru
        _
      %p248 = scmp.le.s32.totalorder 2, %s13
      // Predicated region
      $region41: #{tpu_custom_call.1} parent=5 // pred_check
        %p249 = pneg %p248
      $region42: #{tpu_custom_call.1} parent=5 // pred_check_branch
        %251 = sbr.rel (%p249) target = $region44
      $region43: #{tpu_custom_call.1} parent=5 // pred_region
        %s252 = ssub.s32 %s13, 2
        // Predicated region
        $region45: #{tpu_custom_call.1} parent=43 // pred_check
          %p253 = pneg %p82
        $region46: #{tpu_custom_call.1} parent=43 // pred_check_branch
          %255 = sbr.rel (%p253) target = $region48
        $region47: #{tpu_custom_call.1} parent=43 // pred_region
          %s256 = sand.u32 %s67, 1
          %s257 = scalar_lea.sflag [#allocation6], %s256
          %s258 = sand.u32 %s67, 1
          %s259 = smul.addr %s258, 2
          %s260 = scalar_lea.vmem [#allocation7], %s259
          %261 = dma.done %s257, 32
        $region48: #{tpu_custom_call.1} parent=43 // pred_fallthru
          _
      $region44: #{tpu_custom_call.1} parent=5 // pred_fallthru
        _
    $region6: #{tpu_custom_call.1} parent=1 // loop_footer
      %s17 = sadd.s32 1, %s13
    $region7: #{tpu_custom_call.1} parent=1 // loop_footer_branch
      %12 = sbr.rel target = $region3
    $region8: #{tpu_custom_call.1} parent=1 // loop_exit
      _
    %262 = vsyncpa [#allocation5], 1
    %s263 = scalar_lea.sflag [#allocation5], 1
    %264 = vsyncpa %s263, 1
    %265 = vsyncpa [#allocation6], 1
    %s266 = scalar_lea.sflag [#allocation6], 1
    %267 = vsyncpa %s266, 1

</llo_original>
